<compile_context>
chip_gen: v6e
topology: v6e:2x2x1
jax: 0.10.0
libtpu: 0.0.40
codegen_flags: <defaults>
</compile_context>

<pallas_src>
import jax
import jax.numpy as jnp
from jax.experimental import pallas as pl
from jax.experimental.pallas import tpu as pltpu


def _squared_relu_kernel(x_ref, o_ref):
    v = x_ref[...]
    r = jnp.maximum(v, 0)          # ReLU (dtype-preserving)
    o_ref[...] = r * r             # square, same dtype as input (torch semantics)


def squared_relu(x, *, row_block=512, lane_cols=512):
    """Elementwise square(relu(x)) for an arbitrarily-shaped array.

    The array is flattened into a lane-dense (rows, lane_cols) slab, padded so
    rows is a multiple of the row tile, processed tile-by-tile, then reshaped
    back.  Padding values are zeros, which map to zeros under relu^2, so they
    never contaminate real elements (and are sliced off anyway).
    """
    orig_shape = x.shape
    n = x.size

    # Flatten to a lane-dense 2-D slab: lane_cols is a multiple of 128.
    rows = pl.cdiv(n, lane_cols)
    # Row tile: multiple of 8, capped at row_block, shrunk for tiny inputs.
    rb = min(row_block, ((rows + 7) // 8) * 8)
    rows_pad = pl.cdiv(rows, rb) * rb
    total_pad = rows_pad * lane_cols

    flat = jnp.pad(x.reshape(-1), (0, total_pad - n))
    x2 = flat.reshape(rows_pad, lane_cols)

    out2 = pl.pallas_call(
        _squared_relu_kernel,
        out_shape=jax.ShapeDtypeStruct((rows_pad, lane_cols), x.dtype),
        grid_spec=pl.GridSpec(
            grid=(rows_pad // rb,),
            in_specs=[pl.BlockSpec((rb, lane_cols), lambda i: (i, 0))],
            out_specs=pl.BlockSpec((rb, lane_cols), lambda i: (i, 0)),
        ),
        compiler_params=pltpu.CompilerParams(
            dimension_semantics=("parallel",)),
    )(x2)

    return out2.reshape(-1)[:n].reshape(orig_shape)


def _reference(x):
    return jnp.square(jnp.maximum(x, 0))


if __name__ == "__main__":
    key = jax.random.PRNGKey(0)
    k1, k2 = jax.random.split(key, 2)

    # Main case: lane-aligned small shape (batch=2, channels=4, spatial=16, dim=128).
    x = jax.random.normal(k1, (2, 4, 16, 128), dtype=jnp.float32)
    out = jax.block_until_ready(squared_relu(x))
    ref = _reference(x)
    assert out.shape == x.shape
    assert out.dtype == x.dtype
    assert jnp.allclose(out, ref, atol=0.0, rtol=0.0), (
        float(jnp.max(jnp.abs(out - ref))))

    # Ragged case: exercises the cdiv + pad tail path (no divisibility asserts).
    y = jax.random.normal(k2, (3, 7, 50), dtype=jnp.float32)
    out_y = jax.block_until_ready(squared_relu(y))
    assert out_y.shape == y.shape
    assert jnp.allclose(out_y, _reference(y), atol=0.0, rtol=0.0)

    print("KERNEL_OK")
</pallas_src>

<mosaic_0001>
module attributes {stable_mosaic.version = 11 : i64} {
  func.func @_squared_relu_kernel(%arg0: i32, %arg1: memref<32x512xf32, #tpu.memory_space<vmem>>, %arg2: memref<32x512xf32, #tpu.memory_space<vmem>>) attributes {dimension_semantics = [#tpu.dimension_semantics<parallel>], iteration_bounds = array<i64: 1>, scalar_prefetch = 0 : i64, scratch_operands = 0 : i64, tpu.core_type = #tpu.core_type<tc>, window_params = [{transform_indices = @transform_0, window_bounds = array<i64: 32, 512>}, {transform_indices = @transform_1, window_bounds = array<i64: 32, 512>}]} {
    %c0 = arith.constant 0 : index
    %c0_0 = arith.constant 0 : index
    %0 = vector.load %arg1[%c0, %c0_0] : memref<32x512xf32, #tpu.memory_space<vmem>>, vector<32x512xf32>
    %cst = arith.constant 0.000000e+00 : f32
    %1 = vector.broadcast %cst : f32 to vector<32x512xf32>
    %2 = arith.maximumf %0, %1 : vector<32x512xf32>
    %3 = arith.mulf %2, %2 : vector<32x512xf32>
    %c0_1 = arith.constant 0 : index
    %c0_2 = arith.constant 0 : index
    %4 = vector.load %arg2[%c0_1, %c0_2] : memref<32x512xf32, #tpu.memory_space<vmem>>, vector<32x512xf32>
    tpu.vector_store %arg2[%c0_1, %c0_2], %3 {strides = array<i32>} : memref<32x512xf32, #tpu.memory_space<vmem>>, vector<32x512xf32>,
    return
  }
  func.func @transform_0(%arg0: i32) -> (i32, i32) {
    %c0_i32 = arith.constant 0 : i32
    %c0_i32_0 = arith.constant 0 : i32
    return %arg0, %c0_i32 : i32, i32
  }
  func.func @transform_1(%arg0: i32) -> (i32, i32) {
    %c0_i32 = arith.constant 0 : i32
    %c0_i32_0 = arith.constant 0 : i32
    return %arg0, %c0_i32 : i32, i32
  }
}

</mosaic_0001>

<llo_original>
// kernel: tpu_custom_call.1
$region0: #{tpu_custom_call.1}
  #allocation0 [shape = 'u32[]', space=smem, size = 0x4, offset = 0x4, fixed_abs, tag = 'smem constant byte address 0x4 - core index']
  #allocation1 [shape = 'u32[144,128]{1,0:T(1,128)}', space=vmem, size = 0x12000, scoped, tag = 'internal scratch']
  %s0 = inlined_call_operand.hbm [shape: f32[32,512], index: 0, kind: input, shape index: {}]
  %s1 = inlined_call_operand.hbm [shape: f32[32,512], index: 1, kind: output, shape index: {}]
  %s2 = sld [smem:[#allocation0]]
  $region18: #{tpu_custom_call.1} parent=0
    _
  %s4 = ssub.s32 1, %s2
  %s5 = scalar_select 0, %s4, %s2
  $region1: #{tpu_custom_call.1} parent=0
    #allocation2 [shape = 'u8[65536]{0}', space=vmem, size = 0x10000, scoped, tag = 'input window, operand 0, single buffered']
    #allocation3 [shape = 's32[1]{0}', space=sflag, size = 0x4, scoped, tag = 'scoped memory for tpu_custom_call.1']
    #allocation4 [shape = 's32[1]{0}', space=sflag, size = 0x4, scoped, tag = 'scoped memory for tpu_custom_call.1']
    #allocation5 [shape = 'u8[65536]{0}', space=vmem, size = 0x10000, scoped, tag = 'output window, operand 0, single buffered']
    %6 = vsyncpa [#allocation3], 0
    %7 = vsyncpa [#allocation4], 0
    // Predicated region
    $region2: #{tpu_custom_call.1} parent=1 // pred_check
      _
    $region3: #{tpu_custom_call.1} parent=1 // pred_check_branch
      %9 = sbr.rel (0) target = $region5
    $region4: #{tpu_custom_call.1} parent=1 // pred_region
      %s11 = ssub.s32 2048, 2048
      %12 = vsyncadd [#allocation3], %s11
      %s13 = sshll.u32 [#allocation2], 4
      %s14 = int_to_ptr.vmem [resolvable:$true] %s13
      %19 = dma.hbm_to_vmem [thread:$0]  %s0, 2048, %s14, [#allocation3], 512, 512, 32
    $region5: #{tpu_custom_call.1} parent=1 // pred_fallthru
      _
    // Predicated region
    $region6: #{tpu_custom_call.1} parent=1 // pred_check
      _
    $region7: #{tpu_custom_call.1} parent=1 // pred_check_branch
      %21 = sbr.rel (0) target = $region9
    $region8: #{tpu_custom_call.1} parent=1 // pred_region
      %22 = dma.done [#allocation3], 2048
    $region9: #{tpu_custom_call.1} parent=1 // pred_fallthru
      _
    %v23 = vld [vmem:[#allocation2] sm:$0xff]
    %v24 = vld [vmem:[#allocation2 + $0x8] sm:$0xff]
    %v25 = vld [vmem:[#allocation2 + $0x10] sm:$0xff]
    %v26 = vld [vmem:[#allocation2 + $0x18] sm:$0xff]
    %v27 = vld [vmem:[#allocation2 + $0x20] sm:$0xff]
    %v28 = vld [vmem:[#allocation2 + $0x28] sm:$0xff]
    %v29 = vld [vmem:[#allocation2 + $0x30] sm:$0xff]
    %v30 = vld [vmem:[#allocation2 + $0x38] sm:$0xff]
    %v31 = vld [vmem:[#allocation2 + $0x40] sm:$0xff]
    %v32 = vld [vmem:[#allocation2 + $0x48] sm:$0xff]
    %v33 = vld [vmem:[#allocation2 + $0x50] sm:$0xff]
    %v34 = vld [vmem:[#allocation2 + $0x58] sm:$0xff]
    %v35 = vld [vmem:[#allocation2 + $0x60] sm:$0xff]
    %v36 = vld [vmem:[#allocation2 + $0x68] sm:$0xff]
    %v37 = vld [vmem:[#allocation2 + $0x70] sm:$0xff]
    %v38 = vld [vmem:[#allocation2 + $0x78] sm:$0xff]
    %v39 = vmax.f32 %v23, 0.0
    %v40 = vmax.f32 %v24, 0.0
    %v41 = vmax.f32 %v25, 0.0
    %v42 = vmax.f32 %v26, 0.0
    %v43 = vmax.f32 %v27, 0.0
    %v44 = vmax.f32 %v28, 0.0
    %v45 = vmax.f32 %v29, 0.0
    %v46 = vmax.f32 %v30, 0.0
    %v47 = vmax.f32 %v31, 0.0
    %v48 = vmax.f32 %v32, 0.0
    %v49 = vmax.f32 %v33, 0.0
    %v50 = vmax.f32 %v34, 0.0
    %v51 = vmax.f32 %v35, 0.0
    %v52 = vmax.f32 %v36, 0.0
    %v53 = vmax.f32 %v37, 0.0
    %v54 = vmax.f32 %v38, 0.0
    %v55 = vmul.f32 %v39, %v39
    %v56 = vmul.f32 %v40, %v40
    %v57 = vmul.f32 %v41, %v41
    %v58 = vmul.f32 %v42, %v42
    %v59 = vmul.f32 %v43, %v43
    %v60 = vmul.f32 %v44, %v44
    %v61 = vmul.f32 %v45, %v45
    %v62 = vmul.f32 %v46, %v46
    %v63 = vmul.f32 %v47, %v47
    %v64 = vmul.f32 %v48, %v48
    %v65 = vmul.f32 %v49, %v49
    %v66 = vmul.f32 %v50, %v50
    %v67 = vmul.f32 %v51, %v51
    %v68 = vmul.f32 %v52, %v52
    %v69 = vmul.f32 %v53, %v53
    %v70 = vmul.f32 %v54, %v54
    %71 = vst [vmem:[#allocation5] sm:$0xff] %v55
    %72 = vst [vmem:[#allocation5 + $0x8] sm:$0xff] %v56
    %73 = vst [vmem:[#allocation5 + $0x10] sm:$0xff] %v57
    %74 = vst [vmem:[#allocation5 + $0x18] sm:$0xff] %v58
    %75 = vst [vmem:[#allocation5 + $0x20] sm:$0xff] %v59
    %76 = vst [vmem:[#allocation5 + $0x28] sm:$0xff] %v60
    %77 = vst [vmem:[#allocation5 + $0x30] sm:$0xff] %v61
    %78 = vst [vmem:[#allocation5 + $0x38] sm:$0xff] %v62
    %79 = vst [vmem:[#allocation5 + $0x40] sm:$0xff] %v63
    %80 = vst [vmem:[#allocation5 + $0x48] sm:$0xff] %v64
    %81 = vst [vmem:[#allocation5 + $0x50] sm:$0xff] %v65
    %82 = vst [vmem:[#allocation5 + $0x58] sm:$0xff] %v66
    %83 = vst [vmem:[#allocation5 + $0x60] sm:$0xff] %v67
    %84 = vst [vmem:[#allocation5 + $0x68] sm:$0xff] %v68
    %85 = vst [vmem:[#allocation5 + $0x70] sm:$0xff] %v69
    %86 = vst [vmem:[#allocation5 + $0x78] sm:$0xff] %v70
    // Predicated region
    $region10: #{tpu_custom_call.1} parent=1 // pred_check
      _
    $region11: #{tpu_custom_call.1} parent=1 // pred_check_branch
      %88 = sbr.rel (0) target = $region13
    $region12: #{tpu_custom_call.1} parent=1 // pred_region
      %s90 = ssub.s32 2048, 2048
      %91 = vsyncadd [#allocation4], %s90
      %s92 = sshll.u32 [#allocation5], 4
      %s93 = int_to_ptr.vmem [resolvable:$true] %s92
      %98 = dma.vmem_to_hbm [thread:$0]  %s93, 2048, %s1, [#allocation4], 512, 512, 32
    $region13: #{tpu_custom_call.1} parent=1 // pred_fallthru
      _
    // Predicated region
    $region14: #{tpu_custom_call.1} parent=1 // pred_check
      _
    $region15: #{tpu_custom_call.1} parent=1 // pred_check_branch
      %100 = sbr.rel (0) target = $region17
    $region16: #{tpu_custom_call.1} parent=1 // pred_region
      %101 = dma.done [#allocation4], 2048
    $region17: #{tpu_custom_call.1} parent=1 // pred_fallthru
      _
    %102 = vsyncpa [#allocation3], 1
    %103 = vsyncpa [#allocation4], 1

</llo_original>
